<compile_context>
chip_gen: v7x
topology: tpu7x:2x2x1
jax: 0.10.0
libtpu: 0.0.40
codegen_flags: <defaults>
</compile_context>

<pallas_src>
import functools

import jax
import jax.numpy as jnp
from jax.experimental import pallas as pl
from jax.experimental.pallas import tpu as pltpu

HIDDEN_PAD = 128        # padded hidden / feature width (lane-aligned)
NUM_LAYERS = 6          # 5 hidden + 1 output


def dqn_kernel(x_ref, w_ref, b_ref, out_ref):
    """One batch tile of the full 6-layer MLP; all operands resident in VMEM.

    x_ref  : (BT, 128)      f32 activations (features zero-padded)
    w_ref  : (6, 128, 128)  f32 stacked weights (in, out), zero-padded
    b_ref  : (6, 1, 128)    f32 stacked biases, zero-padded
    out_ref: (BT, 128)      f32 padded Q-value slab (real actions in [:n_actions])
    """
    h = x_ref[...]
    # Hidden layers 0..4: dense + bias + ReLU (MXU matmul, VPU add/max).
    for i in range(NUM_LAYERS - 1):
        y = jnp.dot(h, w_ref[i], preferred_element_type=jnp.float32)
        h = jnp.maximum(y + b_ref[i], 0.0)
    # Output layer: no activation.
    y = jnp.dot(h, w_ref[NUM_LAYERS - 1], preferred_element_type=jnp.float32)
    out_ref[...] = (y + b_ref[NUM_LAYERS - 1]).astype(out_ref.dtype)


def _round_up(n, m):
    return ((n + m - 1) // m) * m


@functools.partial(jax.jit, static_argnames=("n_actions",))
def _dqn_forward_padded(x_pad, w_stack, b_stack, n_actions):
    B_pad = x_pad.shape[0]
    # Batch tile: at least 8 (sublane), at most 256 rows (safe for v7x's 64 MiB
    # VMEM with double-buffered in/out tiles + ~400 KB of resident weights).
    bt = min(256, B_pad)
    num_tiles = B_pad // bt

    flops = 2 * B_pad * HIDDEN_PAD * HIDDEN_PAD * NUM_LAYERS
    bytes_accessed = 4 * (x_pad.size + w_stack.size + b_stack.size
                          + B_pad * HIDDEN_PAD)

    out_pad = pl.pallas_call(
        dqn_kernel,
        out_shape=jax.ShapeDtypeStruct((B_pad, HIDDEN_PAD), jnp.float32),
        grid=(num_tiles,),
        in_specs=[
            pl.BlockSpec((bt, HIDDEN_PAD), lambda i: (i, 0)),
            # Constant block index -> weights/biases stay VMEM-resident across
            # batch tiles (no re-DMA).
            pl.BlockSpec((NUM_LAYERS, HIDDEN_PAD, HIDDEN_PAD),
                         lambda i: (0, 0, 0)),
            pl.BlockSpec((NUM_LAYERS, 1, HIDDEN_PAD), lambda i: (0, 0, 0)),
        ],
        out_specs=pl.BlockSpec((bt, HIDDEN_PAD), lambda i: (i, 0)),
        compiler_params=pltpu.CompilerParams(
            dimension_semantics=("parallel",),   # shards batch tiles on v7x's 2 TCs
            vmem_limit_bytes=4 << 20,
        ),
        cost_estimate=pl.CostEstimate(
            flops=flops, transcendentals=0, bytes_accessed=bytes_accessed),
    )(x_pad, w_stack, b_stack)
    return out_pad[:, :n_actions]


def dqn_forward(x, params):
    """x: (B, input_size) f32. params: list of 6 (W, b), W=(in,out), b=(1,out)."""
    B, input_size = x.shape
    n_actions = params[-1][0].shape[1]
    assert input_size <= HIDDEN_PAD, "input_size > 128 not supported by this packing"
    assert len(params) == NUM_LAYERS

    # --- pack operands into 3 lane-aligned arrays (done once in the wrapper) ---
    w_stack = jnp.zeros((NUM_LAYERS, HIDDEN_PAD, HIDDEN_PAD), jnp.float32)
    b_stack = jnp.zeros((NUM_LAYERS, 1, HIDDEN_PAD), jnp.float32)
    for i, (w, b) in enumerate(params):
        fi, fo = w.shape
        w_stack = w_stack.at[i, :fi, :fo].set(w)
        b_stack = b_stack.at[i, :, :fo].set(b)

    # Zero-pad activations: features -> 128 lanes, batch -> tile multiple.
    B_pad = _round_up(max(B, 8), 8)
    bt = min(256, B_pad)
    B_pad = _round_up(B_pad, bt)
    x_pad = jnp.zeros((B_pad, HIDDEN_PAD), jnp.float32)
    x_pad = x_pad.at[:B, :input_size].set(x)

    out = _dqn_forward_padded(x_pad, w_stack, b_stack, n_actions)
    return out[:B]


# ----------------------------- setup / reference -----------------------------

def init_linear(key, fan_in, fan_out):
    """PyTorch-style nn.Linear init: U(-1/sqrt(fan_in), 1/sqrt(fan_in))."""
    kw, kb = jax.random.split(key)
    bound = 1.0 / jnp.sqrt(jnp.float32(fan_in))
    w = jax.random.uniform(kw, (fan_in, fan_out), jnp.float32, -bound, bound)
    b = jax.random.uniform(kb, (1, fan_out), jnp.float32, -bound, bound)
    return w, b


def make_params(key, input_size, n_actions, hidden=100):
    sizes = [(input_size, hidden),
             (hidden, hidden),
             (hidden, hidden),
             (hidden, hidden),
             (hidden, hidden),
             (hidden, n_actions)]
    keys = jax.random.split(key, len(sizes))
    return [init_linear(k, fi, fo) for k, (fi, fo) in zip(keys, sizes)]


def reference_forward(x, params):
    h = x
    for i, (w, b) in enumerate(params):
        h = h @ w + b
        if i < len(params) - 1:
            h = jnp.maximum(h, 0.0)
    return h


if __name__ == "__main__":
    key = jax.random.PRNGKey(0)
    k_params, k_x = jax.random.split(key)

    n_actions = 2
    input_size = 16   # elevator-environment state vector length
    batch = 8

    params = make_params(k_params, input_size, n_actions)
    x = jax.random.normal(k_x, (batch, input_size), jnp.float32)

    out = dqn_forward(x, params)
    out = jax.block_until_ready(out)

    ref = reference_forward(x, params)
    assert out.shape == (batch, n_actions)
    assert jnp.allclose(out, ref, atol=1e-4, rtol=1e-4), "mismatch vs reference"

    print("KERNEL_OK")
</pallas_src>

<mosaic_0001>
module attributes {stable_mosaic.version = 11 : i64} {
  func.func @dqn_kernel(%arg0: i32, %arg1: memref<8x128xf32, #tpu.memory_space<vmem>>, %arg2: memref<6x128x128xf32, #tpu.memory_space<vmem>>, %arg3: memref<6x1x128xf32, #tpu.memory_space<vmem>>, %arg4: memref<8x128xf32, #tpu.memory_space<vmem>>) attributes {dimension_semantics = [#tpu.dimension_semantics<parallel>], iteration_bounds = array<i64: 1>, scalar_prefetch = 0 : i64, scratch_operands = 0 : i64, tpu.core_type = #tpu.core_type<tc>, window_params = [{transform_indices = @transform_0, window_bounds = array<i64: 8, 128>}, {pipeline_mode = #tpu.pipeline_mode<synchronous>, transform_indices = @transform_1, window_bounds = array<i64: 6, 128, 128>}, {pipeline_mode = #tpu.pipeline_mode<synchronous>, transform_indices = @transform_2, window_bounds = array<i64: 6, 1, 128>}, {transform_indices = @transform_3, window_bounds = array<i64: 8, 128>}]} {
    %c0 = arith.constant 0 : index
    %c0_0 = arith.constant 0 : index
    %0 = vector.load %arg1[%c0, %c0_0] : memref<8x128xf32, #tpu.memory_space<vmem>>, vector<8x128xf32>
    %c0_1 = arith.constant 0 : index
    %c0_2 = arith.constant 0 : index
    %c0_3 = arith.constant 0 : index
    %1 = vector.load %arg2[%c0_1, %c0_2, %c0_3] : memref<6x128x128xf32, #tpu.memory_space<vmem>>, vector<1x128x128xf32>
    %2 = vector.shape_cast %1 : vector<1x128x128xf32> to vector<128x128xf32>
    %cst = arith.constant dense<0.000000e+00> : vector<8x128xf32>
    %3 = tpu.matmul %0, %2, %cst {dimension_numbers = #tpu.dot_dimension_numbers<[1], [0], [0], [1], [0, 0, 1, 1], [], []>} : vector<8x128xf32>, vector<128x128xf32>, vector<8x128xf32> -> vector<8x128xf32>
    %c0_4 = arith.constant 0 : index
    %c0_5 = arith.constant 0 : index
    %c0_6 = arith.constant 0 : index
    %4 = vector.load %arg3[%c0_4, %c0_5, %c0_6] : memref<6x1x128xf32, #tpu.memory_space<vmem>>, vector<1x1x128xf32>
    %5 = vector.shape_cast %4 : vector<1x1x128xf32> to vector<1x128xf32>
    %6 = vector.broadcast %5 : vector<1x128xf32> to vector<8x128xf32>
    %7 = arith.addf %3, %6 : vector<8x128xf32>
    %cst_7 = arith.constant 0.000000e+00 : f32
    %8 = vector.broadcast %cst_7 : f32 to vector<8x128xf32>
    %9 = arith.maximumf %7, %8 : vector<8x128xf32>
    %c1 = arith.constant 1 : index
    %c0_8 = arith.constant 0 : index
    %c0_9 = arith.constant 0 : index
    %10 = vector.load %arg2[%c1, %c0_8, %c0_9] : memref<6x128x128xf32, #tpu.memory_space<vmem>>, vector<1x128x128xf32>
    %11 = vector.shape_cast %10 : vector<1x128x128xf32> to vector<128x128xf32>
    %cst_10 = arith.constant dense<0.000000e+00> : vector<8x128xf32>
    %12 = tpu.matmul %9, %11, %cst_10 {dimension_numbers = #tpu.dot_dimension_numbers<[1], [0], [0], [1], [0, 0, 1, 1], [], []>} : vector<8x128xf32>, vector<128x128xf32>, vector<8x128xf32> -> vector<8x128xf32>
    %c1_11 = arith.constant 1 : index
    %c0_12 = arith.constant 0 : index
    %c0_13 = arith.constant 0 : index
    %13 = vector.load %arg3[%c1_11, %c0_12, %c0_13] : memref<6x1x128xf32, #tpu.memory_space<vmem>>, vector<1x1x128xf32>
    %14 = vector.shape_cast %13 : vector<1x1x128xf32> to vector<1x128xf32>
    %15 = vector.broadcast %14 : vector<1x128xf32> to vector<8x128xf32>
    %16 = arith.addf %12, %15 : vector<8x128xf32>
    %cst_14 = arith.constant 0.000000e+00 : f32
    %17 = vector.broadcast %cst_14 : f32 to vector<8x128xf32>
    %18 = arith.maximumf %16, %17 : vector<8x128xf32>
    %c2 = arith.constant 2 : index
    %c0_15 = arith.constant 0 : index
    %c0_16 = arith.constant 0 : index
    %19 = vector.load %arg2[%c2, %c0_15, %c0_16] : memref<6x128x128xf32, #tpu.memory_space<vmem>>, vector<1x128x128xf32>
    %20 = vector.shape_cast %19 : vector<1x128x128xf32> to vector<128x128xf32>
    %cst_17 = arith.constant dense<0.000000e+00> : vector<8x128xf32>
    %21 = tpu.matmul %18, %20, %cst_17 {dimension_numbers = #tpu.dot_dimension_numbers<[1], [0], [0], [1], [0, 0, 1, 1], [], []>} : vector<8x128xf32>, vector<128x128xf32>, vector<8x128xf32> -> vector<8x128xf32>
    %c2_18 = arith.constant 2 : index
    %c0_19 = arith.constant 0 : index
    %c0_20 = arith.constant 0 : index
    %22 = vector.load %arg3[%c2_18, %c0_19, %c0_20] : memref<6x1x128xf32, #tpu.memory_space<vmem>>, vector<1x1x128xf32>
    %23 = vector.shape_cast %22 : vector<1x1x128xf32> to vector<1x128xf32>
    %24 = vector.broadcast %23 : vector<1x128xf32> to vector<8x128xf32>
    %25 = arith.addf %21, %24 : vector<8x128xf32>
    %cst_21 = arith.constant 0.000000e+00 : f32
    %26 = vector.broadcast %cst_21 : f32 to vector<8x128xf32>
    %27 = arith.maximumf %25, %26 : vector<8x128xf32>
    %c3 = arith.constant 3 : index
    %c0_22 = arith.constant 0 : index
    %c0_23 = arith.constant 0 : index
    %28 = vector.load %arg2[%c3, %c0_22, %c0_23] : memref<6x128x128xf32, #tpu.memory_space<vmem>>, vector<1x128x128xf32>
    %29 = vector.shape_cast %28 : vector<1x128x128xf32> to vector<128x128xf32>
    %cst_24 = arith.constant dense<0.000000e+00> : vector<8x128xf32>
    %30 = tpu.matmul %27, %29, %cst_24 {dimension_numbers = #tpu.dot_dimension_numbers<[1], [0], [0], [1], [0, 0, 1, 1], [], []>} : vector<8x128xf32>, vector<128x128xf32>, vector<8x128xf32> -> vector<8x128xf32>
    %c3_25 = arith.constant 3 : index
    %c0_26 = arith.constant 0 : index
    %c0_27 = arith.constant 0 : index
    %31 = vector.load %arg3[%c3_25, %c0_26, %c0_27] : memref<6x1x128xf32, #tpu.memory_space<vmem>>, vector<1x1x128xf32>
    %32 = vector.shape_cast %31 : vector<1x1x128xf32> to vector<1x128xf32>
    %33 = vector.broadcast %32 : vector<1x128xf32> to vector<8x128xf32>
    %34 = arith.addf %30, %33 : vector<8x128xf32>
    %cst_28 = arith.constant 0.000000e+00 : f32
    %35 = vector.broadcast %cst_28 : f32 to vector<8x128xf32>
    %36 = arith.maximumf %34, %35 : vector<8x128xf32>
    %c4 = arith.constant 4 : index
    %c0_29 = arith.constant 0 : index
    %c0_30 = arith.constant 0 : index
    %37 = vector.load %arg2[%c4, %c0_29, %c0_30] : memref<6x128x128xf32, #tpu.memory_space<vmem>>, vector<1x128x128xf32>
    %38 = vector.shape_cast %37 : vector<1x128x128xf32> to vector<128x128xf32>
    %cst_31 = arith.constant dense<0.000000e+00> : vector<8x128xf32>
    %39 = tpu.matmul %36, %38, %cst_31 {dimension_numbers = #tpu.dot_dimension_numbers<[1], [0], [0], [1], [0, 0, 1, 1], [], []>} : vector<8x128xf32>, vector<128x128xf32>, vector<8x128xf32> -> vector<8x128xf32>
    %c4_32 = arith.constant 4 : index
    %c0_33 = arith.constant 0 : index
    %c0_34 = arith.constant 0 : index
    %40 = vector.load %arg3[%c4_32, %c0_33, %c0_34] : memref<6x1x128xf32, #tpu.memory_space<vmem>>, vector<1x1x128xf32>
    %41 = vector.shape_cast %40 : vector<1x1x128xf32> to vector<1x128xf32>
    %42 = vector.broadcast %41 : vector<1x128xf32> to vector<8x128xf32>
    %43 = arith.addf %39, %42 : vector<8x128xf32>
    %cst_35 = arith.constant 0.000000e+00 : f32
    %44 = vector.broadcast %cst_35 : f32 to vector<8x128xf32>
    %45 = arith.maximumf %43, %44 : vector<8x128xf32>
    %c5 = arith.constant 5 : index
    %c0_36 = arith.constant 0 : index
    %c0_37 = arith.constant 0 : index
    %46 = vector.load %arg2[%c5, %c0_36, %c0_37] : memref<6x128x128xf32, #tpu.memory_space<vmem>>, vector<1x128x128xf32>
    %47 = vector.shape_cast %46 : vector<1x128x128xf32> to vector<128x128xf32>
    %cst_38 = arith.constant dense<0.000000e+00> : vector<8x128xf32>
    %48 = tpu.matmul %45, %47, %cst_38 {dimension_numbers = #tpu.dot_dimension_numbers<[1], [0], [0], [1], [0, 0, 1, 1], [], []>} : vector<8x128xf32>, vector<128x128xf32>, vector<8x128xf32> -> vector<8x128xf32>
    %c5_39 = arith.constant 5 : index
    %c0_40 = arith.constant 0 : index
    %c0_41 = arith.constant 0 : index
    %49 = vector.load %arg3[%c5_39, %c0_40, %c0_41] : memref<6x1x128xf32, #tpu.memory_space<vmem>>, vector<1x1x128xf32>
    %50 = vector.shape_cast %49 : vector<1x1x128xf32> to vector<1x128xf32>
    %51 = vector.broadcast %50 : vector<1x128xf32> to vector<8x128xf32>
    %52 = arith.addf %48, %51 : vector<8x128xf32>
    %c0_42 = arith.constant 0 : index
    %c0_43 = arith.constant 0 : index
    %53 = vector.load %arg4[%c0_42, %c0_43] : memref<8x128xf32, #tpu.memory_space<vmem>>, vector<8x128xf32>
    tpu.vector_store %arg4[%c0_42, %c0_43], %52 {strides = array<i32>} : memref<8x128xf32, #tpu.memory_space<vmem>>, vector<8x128xf32>,
    return
  }
  func.func @transform_0(%arg0: i32) -> (i32, i32) {
    %c0_i32 = arith.constant 0 : i32
    %c0_i32_0 = arith.constant 0 : i32
    return %arg0, %c0_i32 : i32, i32
  }
  func.func @transform_1(%arg0: i32) -> (i32, i32, i32) {
    %c0_i32 = arith.constant 0 : i32
    %c0_i32_0 = arith.constant 0 : i32
    %c0_i32_1 = arith.constant 0 : i32
    %c0_i32_2 = arith.constant 0 : i32
    return %c0_i32, %c0_i32_0, %c0_i32_1 : i32, i32, i32
  }
  func.func @transform_2(%arg0: i32) -> (i32, i32, i32) {
    %c0_i32 = arith.constant 0 : i32
    %c0_i32_0 = arith.constant 0 : i32
    %c0_i32_1 = arith.constant 0 : i32
    %c0_i32_2 = arith.constant 0 : i32
    return %c0_i32, %c0_i32_0, %c0_i32_1 : i32, i32, i32
  }
  func.func @transform_3(%arg0: i32) -> (i32, i32) {
    %c0_i32 = arith.constant 0 : i32
    %c0_i32_0 = arith.constant 0 : i32
    return %arg0, %c0_i32 : i32, i32
  }
}

</mosaic_0001>

<llo_original>
// kernel: _dqn_forward_padded.1
$region0: #{_dqn_forward_padded.1}
  #allocation0 [shape = 'u32[]', space=smem, size = 0x4, offset = 0x4, fixed_abs, tag = 'smem constant byte address 0x4 - core index']
  #allocation1 [shape = 'u32[144,128]{1,0:T(1,128)}', space=vmem, size = 0x12000, scoped, tag = 'internal scratch']
  %s0 = inlined_call_operand.hbm [shape: f32[8,128], index: 0, kind: input, shape index: {}]
  %s1 = inlined_call_operand.hbm [shape: f32[6,128,128], index: 1, kind: input, shape index: {}]
  %s2 = inlined_call_operand.vmem [shape: f32[6,1,128], index: 2, kind: input, shape index: {}]
  %s3 = inlined_call_operand.vmem [shape: f32[8,128], index: 3, kind: output, shape index: {}]
  %s4 = sld [smem:[#allocation0]]
  $region30: #{_dqn_forward_padded.1} parent=0
    _
  %s6 = ssub.s32 1, %s4
  %s7 = scalar_select 0, %s6, %s4
  $region1: #{_dqn_forward_padded.1} parent=0
    #allocation2 [shape = 'u8[4096]{0}', space=vmem, size = 0x1000, scoped, tag = 'input window, operand 0, single buffered']
    #allocation3 [shape = 's32[1]{0}', space=sflag, size = 0x4, scoped, tag = 'scoped memory for _dqn_forward_padded.1']
    #allocation4 [shape = 'u8[393216]{0}', space=vmem, size = 0x60000, scoped, tag = 'input window, operand 1, single buffered']
    #allocation5 [shape = 's32[1]{0}', space=sflag, size = 0x4, scoped, tag = 'scoped memory for _dqn_forward_padded.1']
    %8 = vsyncpa [#allocation3], 0
    %9 = vsyncpa [#allocation5], 0
    // Predicated region
    $region2: #{_dqn_forward_padded.1} parent=1 // pred_check
      _
    $region3: #{_dqn_forward_padded.1} parent=1 // pred_check_branch
      %11 = sbr.rel (0) target = $region5
    $region4: #{_dqn_forward_padded.1} parent=1 // pred_region
      %s13 = ssub.s32 128, 128
      %14 = vsyncadd [#allocation3], %s13
      %s16 = sshll.u32 [#allocation2], 4
      %s17 = int_to_ptr.vmem [resolvable:$true] %s16
      %19 = dma.hbm_to_vmem [thread:$0]  %s0, 128, %s17, [#allocation3]
    $region5: #{_dqn_forward_padded.1} parent=1 // pred_fallthru
      _
    // Predicated region
    $region6: #{_dqn_forward_padded.1} parent=1 // pred_check
      _
    $region7: #{_dqn_forward_padded.1} parent=1 // pred_check_branch
      %21 = sbr.rel (0) target = $region9
    $region8: #{_dqn_forward_padded.1} parent=1 // pred_region
      %s23 = ssub.s32 12288, 12288
      %24 = vsyncadd [#allocation5], %s23
      %s25 = sshll.u32 [#allocation4], 4
      %s26 = int_to_ptr.vmem [resolvable:$true] %s25
      %31 = dma.hbm_to_vmem [thread:$0]  %s1, 12288, %s26, [#allocation5], 128, 128, 8
    $region9: #{_dqn_forward_padded.1} parent=1 // pred_fallthru
      _
    // Predicated region
    $region10: #{_dqn_forward_padded.1} parent=1 // pred_check
      _
    $region11: #{_dqn_forward_padded.1} parent=1 // pred_check_branch
      %33 = sbr.rel (0) target = $region13
    $region12: #{_dqn_forward_padded.1} parent=1 // pred_region
      _
    $region13: #{_dqn_forward_padded.1} parent=1 // pred_fallthru
      _
    // Predicated region
    $region14: #{_dqn_forward_padded.1} parent=1 // pred_check
      _
    $region15: #{_dqn_forward_padded.1} parent=1 // pred_check_branch
      %35 = sbr.rel (0) target = $region17
    $region16: #{_dqn_forward_padded.1} parent=1 // pred_region
      %36 = dma.done [#allocation3], 128
    $region17: #{_dqn_forward_padded.1} parent=1 // pred_fallthru
      _
    // Predicated region
    $region18: #{_dqn_forward_padded.1} parent=1 // pred_check
      _
    $region19: #{_dqn_forward_padded.1} parent=1 // pred_check_branch
      %38 = sbr.rel (0) target = $region21
    $region20: #{_dqn_forward_padded.1} parent=1 // pred_region
      %39 = dma.done [#allocation5], 12288
    $region21: #{_dqn_forward_padded.1} parent=1 // pred_fallthru
      _
    %v40 = vld [vmem:[#allocation2] sm:$0xff]
    %v41 = vld [vmem:[#allocation4] sm:$0xff]
    %v42 = vld [vmem:[#allocation4 + $0x8] sm:$0xff]
    %v43 = vld [vmem:[#allocation4 + $0x10] sm:$0xff]
    %v44 = vld [vmem:[#allocation4 + $0x18] sm:$0xff]
    %v45 = vld [vmem:[#allocation4 + $0x20] sm:$0xff]
    %v46 = vld [vmem:[#allocation4 + $0x28] sm:$0xff]
    %v47 = vld [vmem:[#allocation4 + $0x30] sm:$0xff]
    %v48 = vld [vmem:[#allocation4 + $0x38] sm:$0xff]
    %v49 = vld [vmem:[#allocation4 + $0x40] sm:$0xff]
    %v50 = vld [vmem:[#allocation4 + $0x48] sm:$0xff]
    %v51 = vld [vmem:[#allocation4 + $0x50] sm:$0xff]
    %v52 = vld [vmem:[#allocation4 + $0x58] sm:$0xff]
    %v53 = vld [vmem:[#allocation4 + $0x60] sm:$0xff]
    %v54 = vld [vmem:[#allocation4 + $0x68] sm:$0xff]
    %v55 = vld [vmem:[#allocation4 + $0x70] sm:$0xff]
    %v56 = vld [vmem:[#allocation4 + $0x78] sm:$0xff]
    %v57 = vld [vmem:[%s2] sm:$0x1]
    %v59 = vlaneseq
    %v60 = vshrl.u32 %v59, 7
    %v61 = vsub.s32 0, %v60
    %v62 = vrot.slane %v57, %v61
    %64 = vmatprep.subr.mxu0 0.0
    %65 = vmatpush1.msra.mxu0 %v41
    %66 = vmatprep.subr.mxu0 0.0
    %67 = vmatpush1.msra.mxu0 %v42
    %68 = vmatprep.subr.mxu0 0.0
    %69 = vmatpush1.msra.mxu0 %v43
    %70 = vmatprep.subr.mxu0 0.0
    %71 = vmatpush1.msra.mxu0 %v44
    %72 = vmatprep.subr.mxu0 0.0
    %73 = vmatpush1.msra.mxu0 %v45
    %74 = vmatprep.subr.mxu0 0.0
    %75 = vmatpush1.msra.mxu0 %v46
    %76 = vmatprep.subr.mxu0 0.0
    %77 = vmatpush1.msra.mxu0 %v47
    %78 = vmatprep.subr.mxu0 0.0
    %79 = vmatpush1.msra.mxu0 %v48
    %80 = vmatprep.subr.mxu0 0.0
    %81 = vmatpush1.msra.mxu0 %v49
    %82 = vmatprep.subr.mxu0 0.0
    %83 = vmatpush1.msra.mxu0 %v50
    %84 = vmatprep.subr.mxu0 0.0
    %85 = vmatpush1.msra.mxu0 %v51
    %86 = vmatprep.subr.mxu0 0.0
    %87 = vmatpush1.msra.mxu0 %v52
    %88 = vmatprep.subr.mxu0 0.0
    %89 = vmatpush1.msra.mxu0 %v53
    %90 = vmatprep.subr.mxu0 0.0
    %91 = vmatpush1.msra.mxu0 %v54
    %92 = vmatprep.subr.mxu0 0.0
    %93 = vmatpush1.msra.mxu0 %v55
    %94 = vmatprep.subr.mxu0 0.0
    %95 = vmatpush1.msra.mxu0 %v56
    %96 = vmatprep.subr.mxu0 0.0
    %97 = vmatpush1.msra.mxu0 0.0
    %98 = vmatprep.subr.mxu0 0.0
    %99 = vmatpush1.msra.mxu0 0.0
    %100 = vmatprep.subr.mxu0 0.0
    %101 = vmatpush1.msra.mxu0 0.0
    %102 = vmatprep.subr.mxu0 0.0
    %103 = vmatpush1.msra.mxu0 0.0
    %104 = vmatprep.subr.mxu0 0.0
    %105 = vmatpush1.msra.mxu0 0.0
    %106 = vmatprep.subr.mxu0 0.0
    %107 = vmatpush1.msra.mxu0 0.0
    %108 = vmatprep.subr.mxu0 0.0
    %109 = vmatpush1.msra.mxu0 0.0
    %110 = vmatprep.subr.mxu0 0.0
    %111 = vmatpush1.msra.mxu0 0.0
    %112 = vmatprep.subr.mxu0 0.0
    %113 = vmatpush1.msra.mxu0 0.0
    %114 = vmatprep.subr.mxu0 0.0
    %115 = vmatpush1.msra.mxu0 0.0
    %116 = vmatprep.subr.mxu0 0.0
    %117 = vmatpush1.msra.mxu0 0.0
    %118 = vmatprep.subr.mxu0 0.0
    %119 = vmatpush1.msra.mxu0 0.0
    %120 = vmatprep.subr.mxu0 0.0
    %121 = vmatpush1.msra.mxu0 0.0
    %122 = vmatprep.subr.mxu0 0.0
    %123 = vmatpush1.msra.mxu0 0.0
    %124 = vmatprep.subr.mxu0 0.0
    %125 = vmatpush1.msra.mxu0 0.0
    %126 = vmatprep.subr.mxu0 0.0
    %127 = vmatpush1.msra.mxu0 0.0
    %128 = vmatprep.mubr.f32.mxu0 0.0
    %129 = vmatmul.mubr.f32.gmra.mrb[0].mxu0 %v40
    %v130 = vpop.f32.mrb[0].mxu0
    %v131 = vadd.f32 %v62, %v130
    %v132 = vpop.f32.mrb[0].mxu0
    %133 = vdwg.mxu0
    %v134 = vmax.f32 %v131, 0.0
    %s135 = scalar_lea.vmem [#allocation4], 128
    %v136 = vld [vmem:[%s135] sm:$0xff]
    %v137 = vld [vmem:[%s135 + $0x8] sm:$0xff]
    %v138 = vld [vmem:[%s135 + $0x10] sm:$0xff]
    %v139 = vld [vmem:[%s135 + $0x18] sm:$0xff]
    %v140 = vld [vmem:[%s135 + $0x20] sm:$0xff]
    %v141 = vld [vmem:[%s135 + $0x28] sm:$0xff]
    %v142 = vld [vmem:[%s135 + $0x30] sm:$0xff]
    %v143 = vld [vmem:[%s135 + $0x38] sm:$0xff]
    %v144 = vld [vmem:[%s135 + $0x40] sm:$0xff]
    %v145 = vld [vmem:[%s135 + $0x48] sm:$0xff]
    %v146 = vld [vmem:[%s135 + $0x50] sm:$0xff]
    %v147 = vld [vmem:[%s135 + $0x58] sm:$0xff]
    %v148 = vld [vmem:[%s135 + $0x60] sm:$0xff]
    %v149 = vld [vmem:[%s135 + $0x68] sm:$0xff]
    %v150 = vld [vmem:[%s135 + $0x70] sm:$0xff]
    %v151 = vld [vmem:[%s135 + $0x78] sm:$0xff]
    %s152 = scalar_lea.vmem %s2, 1
    %v153 = vld [vmem:[%s152] sm:$0x1]
    %v155 = vlaneseq
    %v156 = vshrl.u32 %v155, 7
    %v157 = vsub.s32 0, %v156
    %v158 = vrot.slane %v153, %v157
    %160 = vmatprep.subr.mxu0 0.0
    %161 = vmatpush1.msra.mxu0 %v136
    %162 = vmatprep.subr.mxu0 0.0
    %163 = vmatpush1.msra.mxu0 %v137
    %164 = vmatprep.subr.mxu0 0.0
    %165 = vmatpush1.msra.mxu0 %v138
    %166 = vmatprep.subr.mxu0 0.0
    %167 = vmatpush1.msra.mxu0 %v139
    %168 = vmatprep.subr.mxu0 0.0
    %169 = vmatpush1.msra.mxu0 %v140
    %170 = vmatprep.subr.mxu0 0.0
    %171 = vmatpush1.msra.mxu0 %v141
    %172 = vmatprep.subr.mxu0 0.0
    %173 = vmatpush1.msra.mxu0 %v142
    %174 = vmatprep.subr.mxu0 0.0
    %175 = vmatpush1.msra.mxu0 %v143
    %176 = vmatprep.subr.mxu0 0.0
    %177 = vmatpush1.msra.mxu0 %v144
    %178 = vmatprep.subr.mxu0 0.0
    %179 = vmatpush1.msra.mxu0 %v145
    %180 = vmatprep.subr.mxu0 0.0
    %181 = vmatpush1.msra.mxu0 %v146
    %182 = vmatprep.subr.mxu0 0.0
    %183 = vmatpush1.msra.mxu0 %v147
    %184 = vmatprep.subr.mxu0 0.0
    %185 = vmatpush1.msra.mxu0 %v148
    %186 = vmatprep.subr.mxu0 0.0
    %187 = vmatpush1.msra.mxu0 %v149
    %188 = vmatprep.subr.mxu0 0.0
    %189 = vmatpush1.msra.mxu0 %v150
    %190 = vmatprep.subr.mxu0 0.0
    %191 = vmatpush1.msra.mxu0 %v151
    %192 = vmatprep.subr.mxu0 0.0
    %193 = vmatpush1.msra.mxu0 0.0
    %194 = vmatprep.subr.mxu0 0.0
    %195 = vmatpush1.msra.mxu0 0.0
    %196 = vmatprep.subr.mxu0 0.0
    %197 = vmatpush1.msra.mxu0 0.0
    %198 = vmatprep.subr.mxu0 0.0
    %199 = vmatpush1.msra.mxu0 0.0
    %200 = vmatprep.subr.mxu0 0.0
    %201 = vmatpush1.msra.mxu0 0.0
    %202 = vmatprep.subr.mxu0 0.0
    %203 = vmatpush1.msra.mxu0 0.0
    %204 = vmatprep.subr.mxu0 0.0
    %205 = vmatpush1.msra.mxu0 0.0
    %206 = vmatprep.subr.mxu0 0.0
    %207 = vmatpush1.msra.mxu0 0.0
    %208 = vmatprep.subr.mxu0 0.0
    %209 = vmatpush1.msra.mxu0 0.0
    %210 = vmatprep.subr.mxu0 0.0
    %211 = vmatpush1.msra.mxu0 0.0
    %212 = vmatprep.subr.mxu0 0.0
    %213 = vmatpush1.msra.mxu0 0.0
    %214 = vmatprep.subr.mxu0 0.0
    %215 = vmatpush1.msra.mxu0 0.0
    %216 = vmatprep.subr.mxu0 0.0
    %217 = vmatpush1.msra.mxu0 0.0
    %218 = vmatprep.subr.mxu0 0.0
    %219 = vmatpush1.msra.mxu0 0.0
    %220 = vmatprep.subr.mxu0 0.0
    %221 = vmatpush1.msra.mxu0 0.0
    %222 = vmatprep.subr.mxu0 0.0
    %223 = vmatpush1.msra.mxu0 0.0
    %224 = vmatprep.mubr.f32.mxu0 0.0
    %225 = vmatmul.mubr.f32.gmra.mrb[0].mxu0 %v134
    %v226 = vpop.f32.mrb[0].mxu0
    %v227 = vadd.f32 %v158, %v226
    %v228 = vpop.f32.mrb[0].mxu0
    %229 = vdwg.mxu0
    %v230 = vmax.f32 %v227, 0.0
    %s231 = scalar_lea.vmem [#allocation4], 256
    %v232 = vld [vmem:[%s231] sm:$0xff]
    %v233 = vld [vmem:[%s231 + $0x8] sm:$0xff]
    %v234 = vld [vmem:[%s231 + $0x10] sm:$0xff]
    %v235 = vld [vmem:[%s231 + $0x18] sm:$0xff]
    %v236 = vld [vmem:[%s231 + $0x20] sm:$0xff]
    %v237 = vld [vmem:[%s231 + $0x28] sm:$0xff]
    %v238 = vld [vmem:[%s231 + $0x30] sm:$0xff]
    %v239 = vld [vmem:[%s231 + $0x38] sm:$0xff]
    %v240 = vld [vmem:[%s231 + $0x40] sm:$0xff]
    %v241 = vld [vmem:[%s231 + $0x48] sm:$0xff]
    %v242 = vld [vmem:[%s231 + $0x50] sm:$0xff]
    %v243 = vld [vmem:[%s231 + $0x58] sm:$0xff]
    %v244 = vld [vmem:[%s231 + $0x60] sm:$0xff]
    %v245 = vld [vmem:[%s231 + $0x68] sm:$0xff]
    %v246 = vld [vmem:[%s231 + $0x70] sm:$0xff]
    %v247 = vld [vmem:[%s231 + $0x78] sm:$0xff]
    %s248 = scalar_lea.vmem %s2, 2
    %v249 = vld [vmem:[%s248] sm:$0x1]
    %v251 = vlaneseq
    %v252 = vshrl.u32 %v251, 7
    %v253 = vsub.s32 0, %v252
    %v254 = vrot.slane %v249, %v253
    %256 = vmatprep.subr.mxu0 0.0
    %257 = vmatpush1.msra.mxu0 %v232
    %258 = vmatprep.subr.mxu0 0.0
    %259 = vmatpush1.msra.mxu0 %v233
    %260 = vmatprep.subr.mxu0 0.0
    %261 = vmatpush1.msra.mxu0 %v234
    %262 = vmatprep.subr.mxu0 0.0
    %263 = vmatpush1.msra.mxu0 %v235
    %264 = vmatprep.subr.mxu0 0.0
    %265 = vmatpush1.msra.mxu0 %v236
    %266 = vmatprep.subr.mxu0 0.0
    %267 = vmatpush1.msra.mxu0 %v237
    %268 = vmatprep.subr.mxu0 0.0
    %269 = vmatpush1.msra.mxu0 %v238
    %270 = vmatprep.subr.mxu0 0.0
    %271 = vmatpush1.msra.mxu0 %v239
    %272 = vmatprep.subr.mxu0 0.0
    %273 = vmatpush1.msra.mxu0 %v240
    %274 = vmatprep.subr.mxu0 0.0
    %275 = vmatpush1.msra.mxu0 %v241
    %276 = vmatprep.subr.mxu0 0.0
    %277 = vmatpush1.msra.mxu0 %v242
    %278 = vmatprep.subr.mxu0 0.0
    %279 = vmatpush1.msra.mxu0 %v243
    %280 = vmatprep.subr.mxu0 0.0
    %281 = vmatpush1.msra.mxu0 %v244
    %282 = vmatprep.subr.mxu0 0.0
    %283 = vmatpush1.msra.mxu0 %v245
    %284 = vmatprep.subr.mxu0 0.0
    %285 = vmatpush1.msra.mxu0 %v246
    %286 = vmatprep.subr.mxu0 0.0
    %287 = vmatpush1.msra.mxu0 %v247
    %288 = vmatprep.subr.mxu0 0.0
    %289 = vmatpush1.msra.mxu0 0.0
    %290 = vmatprep.subr.mxu0 0.0
    %291 = vmatpush1.msra.mxu0 0.0
    %292 = vmatprep.subr.mxu0 0.0
    %293 = vmatpush1.msra.mxu0 0.0
    %294 = vmatprep.subr.mxu0 0.0
    %295 = vmatpush1.msra.mxu0 0.0
    %296 = vmatprep.subr.mxu0 0.0
    %297 = vmatpush1.msra.mxu0 0.0
    %298 = vmatprep.subr.mxu0 0.0
    %299 = vmatpush1.msra.mxu0 0.0
    %300 = vmatprep.subr.mxu0 0.0
    %301 = vmatpush1.msra.mxu0 0.0
    %302 = vmatprep.subr.mxu0 0.0
    %303 = vmatpush1.msra.mxu0 0.0
    %304 = vmatprep.subr.mxu0 0.0
    %305 = vmatpush1.msra.mxu0 0.0
    %306 = vmatprep.subr.mxu0 0.0
    %307 = vmatpush1.msra.mxu0 0.0
    %308 = vmatprep.subr.mxu0 0.0
    %309 = vmatpush1.msra.mxu0 0.0
    %310 = vmatprep.subr.mxu0 0.0
    %311 = vmatpush1.msra.mxu0 0.0
    %312 = vmatprep.subr.mxu0 0.0
    %313 = vmatpush1.msra.mxu0 0.0
    %314 = vmatprep.subr.mxu0 0.0
    %315 = vmatpush1.msra.mxu0 0.0
    %316 = vmatprep.subr.mxu0 0.0
    %317 = vmatpush1.msra.mxu0 0.0
    %318 = vmatprep.subr.mxu0 0.0
    %319 = vmatpush1.msra.mxu0 0.0
    %320 = vmatprep.mubr.f32.mxu0 0.0
    %321 = vmatmul.mubr.f32.gmra.mrb[0].mxu0 %v230
    %v322 = vpop.f32.mrb[0].mxu0
    %v323 = vadd.f32 %v254, %v322
    %v324 = vpop.f32.mrb[0].mxu0
    %325 = vdwg.mxu0
    %v326 = vmax.f32 %v323, 0.0
    %s327 = scalar_lea.vmem [#allocation4], 384
    %v328 = vld [vmem:[%s327] sm:$0xff]
    %v329 = vld [vmem:[%s327 + $0x8] sm:$0xff]
    %v330 = vld [vmem:[%s327 + $0x10] sm:$0xff]
    %v331 = vld [vmem:[%s327 + $0x18] sm:$0xff]
    %v332 = vld [vmem:[%s327 + $0x20] sm:$0xff]
    %v333 = vld [vmem:[%s327 + $0x28] sm:$0xff]
    %v334 = vld [vmem:[%s327 + $0x30] sm:$0xff]
    %v335 = vld [vmem:[%s327 + $0x38] sm:$0xff]
    %v336 = vld [vmem:[%s327 + $0x40] sm:$0xff]
    %v337 = vld [vmem:[%s327 + $0x48] sm:$0xff]
    %v338 = vld [vmem:[%s327 + $0x50] sm:$0xff]
    %v339 = vld [vmem:[%s327 + $0x58] sm:$0xff]
    %v340 = vld [vmem:[%s327 + $0x60] sm:$0xff]
    %v341 = vld [vmem:[%s327 + $0x68] sm:$0xff]
    %v342 = vld [vmem:[%s327 + $0x70] sm:$0xff]
    %v343 = vld [vmem:[%s327 + $0x78] sm:$0xff]
    %s344 = scalar_lea.vmem %s2, 3
    %v345 = vld [vmem:[%s344] sm:$0x1]
    %v347 = vlaneseq
    %v348 = vshrl.u32 %v347, 7
    %v349 = vsub.s32 0, %v348
    %v350 = vrot.slane %v345, %v349
    %352 = vmatprep.subr.mxu0 0.0
    %353 = vmatpush1.msra.mxu0 %v328
    %354 = vmatprep.subr.mxu0 0.0
    %355 = vmatpush1.msra.mxu0 %v329
    %356 = vmatprep.subr.mxu0 0.0
    %357 = vmatpush1.msra.mxu0 %v330
    %358 = vmatprep.subr.mxu0 0.0
    %359 = vmatpush1.msra.mxu0 %v331
    %360 = vmatprep.subr.mxu0 0.0
    %361 = vmatpush1.msra.mxu0 %v332
    %362 = vmatprep.subr.mxu0 0.0
    %363 = vmatpush1.msra.mxu0 %v333
    %364 = vmatprep.subr.mxu0 0.0
    %365 = vmatpush1.msra.mxu0 %v334
    %366 = vmatprep.subr.mxu0 0.0
    %367 = vmatpush1.msra.mxu0 %v335
    %368 = vmatprep.subr.mxu0 0.0
    %369 = vmatpush1.msra.mxu0 %v336
    %370 = vmatprep.subr.mxu0 0.0
    %371 = vmatpush1.msra.mxu0 %v337
    %372 = vmatprep.subr.mxu0 0.0
    %373 = vmatpush1.msra.mxu0 %v338
    %374 = vmatprep.subr.mxu0 0.0
    %375 = vmatpush1.msra.mxu0 %v339
    %376 = vmatprep.subr.mxu0 0.0
    %377 = vmatpush1.msra.mxu0 %v340
    %378 = vmatprep.subr.mxu0 0.0
    %379 = vmatpush1.msra.mxu0 %v341
    %380 = vmatprep.subr.mxu0 0.0
    %381 = vmatpush1.msra.mxu0 %v342
    %382 = vmatprep.subr.mxu0 0.0
    %383 = vmatpush1.msra.mxu0 %v343
    %384 = vmatprep.subr.mxu0 0.0
    %385 = vmatpush1.msra.mxu0 0.0
    %386 = vmatprep.subr.mxu0 0.0
    %387 = vmatpush1.msra.mxu0 0.0
    %388 = vmatprep.subr.mxu0 0.0
    %389 = vmatpush1.msra.mxu0 0.0
    %390 = vmatprep.subr.mxu0 0.0
    %391 = vmatpush1.msra.mxu0 0.0
    %392 = vmatprep.subr.mxu0 0.0
    %393 = vmatpush1.msra.mxu0 0.0
    %394 = vmatprep.subr.mxu0 0.0
    %395 = vmatpush1.msra.mxu0 0.0
    %396 = vmatprep.subr.mxu0 0.0
    %397 = vmatpush1.msra.mxu0 0.0
    %398 = vmatprep.subr.mxu0 0.0
    %399 = vmatpush1.msra.mxu0 0.0
    %400 = vmatprep.subr.mxu0 0.0
    %401 = vmatpush1.msra.mxu0 0.0
    %402 = vmatprep.subr.mxu0 0.0
    %403 = vmatpush1.msra.mxu0 0.0
    %404 = vmatprep.subr.mxu0 0.0
    %405 = vmatpush1.msra.mxu0 0.0
    %406 = vmatprep.subr.mxu0 0.0
    %407 = vmatpush1.msra.mxu0 0.0
    %408 = vmatprep.subr.mxu0 0.0
    %409 = vmatpush1.msra.mxu0 0.0
    %410 = vmatprep.subr.mxu0 0.0
    %411 = vmatpush1.msra.mxu0 0.0
    %412 = vmatprep.subr.mxu0 0.0
    %413 = vmatpush1.msra.mxu0 0.0
    %414 = vmatprep.subr.mxu0 0.0
    %415 = vmatpush1.msra.mxu0 0.0
    %416 = vmatprep.mubr.f32.mxu0 0.0
    %417 = vmatmul.mubr.f32.gmra.mrb[0].mxu0 %v326
    %v418 = vpop.f32.mrb[0].mxu0
    %v419 = vadd.f32 %v350, %v418
    %v420 = vpop.f32.mrb[0].mxu0
    %421 = vdwg.mxu0
    %v422 = vmax.f32 %v419, 0.0
    %s423 = scalar_lea.vmem [#allocation4], 512
    %v424 = vld [vmem:[%s423] sm:$0xff]
    %v425 = vld [vmem:[%s423 + $0x8] sm:$0xff]
    %v426 = vld [vmem:[%s423 + $0x10] sm:$0xff]
    %v427 = vld [vmem:[%s423 + $0x18] sm:$0xff]
    %v428 = vld [vmem:[%s423 + $0x20] sm:$0xff]
    %v429 = vld [vmem:[%s423 + $0x28] sm:$0xff]
    %v430 = vld [vmem:[%s423 + $0x30] sm:$0xff]
    %v431 = vld [vmem:[%s423 + $0x38] sm:$0xff]
    %v432 = vld [vmem:[%s423 + $0x40] sm:$0xff]
    %v433 = vld [vmem:[%s423 + $0x48] sm:$0xff]
    %v434 = vld [vmem:[%s423 + $0x50] sm:$0xff]
    %v435 = vld [vmem:[%s423 + $0x58] sm:$0xff]
    %v436 = vld [vmem:[%s423 + $0x60] sm:$0xff]
    %v437 = vld [vmem:[%s423 + $0x68] sm:$0xff]
    %v438 = vld [vmem:[%s423 + $0x70] sm:$0xff]
    %v439 = vld [vmem:[%s423 + $0x78] sm:$0xff]
    %s440 = scalar_lea.vmem %s2, 4
    %v441 = vld [vmem:[%s440] sm:$0x1]
    %v443 = vlaneseq
    %v444 = vshrl.u32 %v443, 7
    %v445 = vsub.s32 0, %v444
    %v446 = vrot.slane %v441, %v445
    %448 = vmatprep.subr.mxu0 0.0
    %449 = vmatpush1.msra.mxu0 %v424
    %450 = vmatprep.subr.mxu0 0.0
    %451 = vmatpush1.msra.mxu0 %v425
    %452 = vmatprep.subr.mxu0 0.0
    %453 = vmatpush1.msra.mxu0 %v426
    %454 = vmatprep.subr.mxu0 0.0
    %455 = vmatpush1.msra.mxu0 %v427
    %456 = vmatprep.subr.mxu0 0.0
    %457 = vmatpush1.msra.mxu0 %v428
    %458 = vmatprep.subr.mxu0 0.0
    %459 = vmatpush1.msra.mxu0 %v429
    %460 = vmatprep.subr.mxu0 0.0
    %461 = vmatpush1.msra.mxu0 %v430
    %462 = vmatprep.subr.mxu0 0.0
    %463 = vmatpush1.msra.mxu0 %v431
    %464 = vmatprep.subr.mxu0 0.0
    %465 = vmatpush1.msra.mxu0 %v432
    %466 = vmatprep.subr.mxu0 0.0
    %467 = vmatpush1.msra.mxu0 %v433
    %468 = vmatprep.subr.mxu0 0.0
    %469 = vmatpush1.msra.mxu0 %v434
    %470 = vmatprep.subr.mxu0 0.0
    %471 = vmatpush1.msra.mxu0 %v435
    %472 = vmatprep.subr.mxu0 0.0
    %473 = vmatpush1.msra.mxu0 %v436
    %474 = vmatprep.subr.mxu0 0.0
    %475 = vmatpush1.msra.mxu0 %v437
    %476 = vmatprep.subr.mxu0 0.0
    %477 = vmatpush1.msra.mxu0 %v438
    %478 = vmatprep.subr.mxu0 0.0
    %479 = vmatpush1.msra.mxu0 %v439
    %480 = vmatprep.subr.mxu0 0.0
    %481 = vmatpush1.msra.mxu0 0.0
    %482 = vmatprep.subr.mxu0 0.0
    %483 = vmatpush1.msra.mxu0 0.0
    %484 = vmatprep.subr.mxu0 0.0
    %485 = vmatpush1.msra.mxu0 0.0
    %486 = vmatprep.subr.mxu0 0.0
    %487 = vmatpush1.msra.mxu0 0.0
    %488 = vmatprep.subr.mxu0 0.0
    %489 = vmatpush1.msra.mxu0 0.0
    %490 = vmatprep.subr.mxu0 0.0
    %491 = vmatpush1.msra.mxu0 0.0
    %492 = vmatprep.subr.mxu0 0.0
    %493 = vmatpush1.msra.mxu0 0.0
    %494 = vmatprep.subr.mxu0 0.0
    %495 = vmatpush1.msra.mxu0 0.0
    %496 = vmatprep.subr.mxu0 0.0
    %497 = vmatpush1.msra.mxu0 0.0
    %498 = vmatprep.subr.mxu0 0.0
    %499 = vmatpush1.msra.mxu0 0.0
    %500 = vmatprep.subr.mxu0 0.0
    %501 = vmatpush1.msra.mxu0 0.0
    %502 = vmatprep.subr.mxu0 0.0
    %503 = vmatpush1.msra.mxu0 0.0
    %504 = vmatprep.subr.mxu0 0.0
    %505 = vmatpush1.msra.mxu0 0.0
    %506 = vmatprep.subr.mxu0 0.0
    %507 = vmatpush1.msra.mxu0 0.0
    %508 = vmatprep.subr.mxu0 0.0
    %509 = vmatpush1.msra.mxu0 0.0
    %510 = vmatprep.subr.mxu0 0.0
    %511 = vmatpush1.msra.mxu0 0.0
    %512 = vmatprep.mubr.f32.mxu0 0.0
    %513 = vmatmul.mubr.f32.gmra.mrb[0].mxu0 %v422
    %v514 = vpop.f32.mrb[0].mxu0
    %v515 = vadd.f32 %v446, %v514
    %v516 = vpop.f32.mrb[0].mxu0
    %517 = vdwg.mxu0
    %v518 = vmax.f32 %v515, 0.0
    %s519 = scalar_lea.vmem [#allocation4], 640
    %v520 = vld [vmem:[%s519] sm:$0xff]
    %v521 = vld [vmem:[%s519 + $0x8] sm:$0xff]
    %v522 = vld [vmem:[%s519 + $0x10] sm:$0xff]
    %v523 = vld [vmem:[%s519 + $0x18] sm:$0xff]
    %v524 = vld [vmem:[%s519 + $0x20] sm:$0xff]
    %v525 = vld [vmem:[%s519 + $0x28] sm:$0xff]
    %v526 = vld [vmem:[%s519 + $0x30] sm:$0xff]
    %v527 = vld [vmem:[%s519 + $0x38] sm:$0xff]
    %v528 = vld [vmem:[%s519 + $0x40] sm:$0xff]
    %v529 = vld [vmem:[%s519 + $0x48] sm:$0xff]
    %v530 = vld [vmem:[%s519 + $0x50] sm:$0xff]
    %v531 = vld [vmem:[%s519 + $0x58] sm:$0xff]
    %v532 = vld [vmem:[%s519 + $0x60] sm:$0xff]
    %v533 = vld [vmem:[%s519 + $0x68] sm:$0xff]
    %v534 = vld [vmem:[%s519 + $0x70] sm:$0xff]
    %v535 = vld [vmem:[%s519 + $0x78] sm:$0xff]
    %s536 = scalar_lea.vmem %s2, 5
    %v537 = vld [vmem:[%s536] sm:$0x1]
    %v539 = vlaneseq
    %v540 = vshrl.u32 %v539, 7
    %v541 = vsub.s32 0, %v540
    %v542 = vrot.slane %v537, %v541
    %544 = vmatprep.subr.mxu0 0.0
    %545 = vmatpush1.msra.mxu0 %v520
    %546 = vmatprep.subr.mxu0 0.0
    %547 = vmatpush1.msra.mxu0 %v521
    %548 = vmatprep.subr.mxu0 0.0
    %549 = vmatpush1.msra.mxu0 %v522
    %550 = vmatprep.subr.mxu0 0.0
    %551 = vmatpush1.msra.mxu0 %v523
    %552 = vmatprep.subr.mxu0 0.0
    %553 = vmatpush1.msra.mxu0 %v524
    %554 = vmatprep.subr.mxu0 0.0
    %555 = vmatpush1.msra.mxu0 %v525
    %556 = vmatprep.subr.mxu0 0.0
    %557 = vmatpush1.msra.mxu0 %v526
    %558 = vmatprep.subr.mxu0 0.0
    %559 = vmatpush1.msra.mxu0 %v527
    %560 = vmatprep.subr.mxu0 0.0
    %561 = vmatpush1.msra.mxu0 %v528
    %562 = vmatprep.subr.mxu0 0.0
    %563 = vmatpush1.msra.mxu0 %v529
    %564 = vmatprep.subr.mxu0 0.0
    %565 = vmatpush1.msra.mxu0 %v530
    %566 = vmatprep.subr.mxu0 0.0
    %567 = vmatpush1.msra.mxu0 %v531
    %568 = vmatprep.subr.mxu0 0.0
    %569 = vmatpush1.msra.mxu0 %v532
    %570 = vmatprep.subr.mxu0 0.0
    %571 = vmatpush1.msra.mxu0 %v533
    %572 = vmatprep.subr.mxu0 0.0
    %573 = vmatpush1.msra.mxu0 %v534
    %574 = vmatprep.subr.mxu0 0.0
    %575 = vmatpush1.msra.mxu0 %v535
    %576 = vmatprep.subr.mxu0 0.0
    %577 = vmatpush1.msra.mxu0 0.0
    %578 = vmatprep.subr.mxu0 0.0
    %579 = vmatpush1.msra.mxu0 0.0
    %580 = vmatprep.subr.mxu0 0.0
    %581 = vmatpush1.msra.mxu0 0.0
    %582 = vmatprep.subr.mxu0 0.0
    %583 = vmatpush1.msra.mxu0 0.0
    %584 = vmatprep.subr.mxu0 0.0
    %585 = vmatpush1.msra.mxu0 0.0
    %586 = vmatprep.subr.mxu0 0.0
    %587 = vmatpush1.msra.mxu0 0.0
    %588 = vmatprep.subr.mxu0 0.0
    %589 = vmatpush1.msra.mxu0 0.0
    %590 = vmatprep.subr.mxu0 0.0
    %591 = vmatpush1.msra.mxu0 0.0
    %592 = vmatprep.subr.mxu0 0.0
    %593 = vmatpush1.msra.mxu0 0.0
    %594 = vmatprep.subr.mxu0 0.0
    %595 = vmatpush1.msra.mxu0 0.0
    %596 = vmatprep.subr.mxu0 0.0
    %597 = vmatpush1.msra.mxu0 0.0
    %598 = vmatprep.subr.mxu0 0.0
    %599 = vmatpush1.msra.mxu0 0.0
    %600 = vmatprep.subr.mxu0 0.0
    %601 = vmatpush1.msra.mxu0 0.0
    %602 = vmatprep.subr.mxu0 0.0
    %603 = vmatpush1.msra.mxu0 0.0
    %604 = vmatprep.subr.mxu0 0.0
    %605 = vmatpush1.msra.mxu0 0.0
    %606 = vmatprep.subr.mxu0 0.0
    %607 = vmatpush1.msra.mxu0 0.0
    %608 = vmatprep.mubr.f32.mxu0 0.0
    %609 = vmatmul.mubr.f32.gmra.mrb[0].mxu0 %v518
    %v610 = vpop.f32.mrb[0].mxu0
    %v611 = vadd.f32 %v542, %v610
    %v612 = vpop.f32.mrb[0].mxu0
    %613 = vdwg.mxu0
    %614 = vst [vmem:[%s3] sm:$0xff] %v611
    // Predicated region
    $region22: #{_dqn_forward_padded.1} parent=1 // pred_check
      _
    $region23: #{_dqn_forward_padded.1} parent=1 // pred_check_branch
      %616 = sbr.rel (0) target = $region25
    $region24: #{_dqn_forward_padded.1} parent=1 // pred_region
      _
    $region25: #{_dqn_forward_padded.1} parent=1 // pred_fallthru
      _
    // Predicated region
    $region26: #{_dqn_forward_padded.1} parent=1 // pred_check
      _
    $region27: #{_dqn_forward_padded.1} parent=1 // pred_check_branch
      %618 = sbr.rel (0) target = $region29
    $region28: #{_dqn_forward_padded.1} parent=1 // pred_region
      _
    $region29: #{_dqn_forward_padded.1} parent=1 // pred_fallthru
      _
    %619 = vsyncpa [#allocation3], 1
    %620 = vsyncpa [#allocation5], 1

</llo_original>
